<compile_context>
chip_gen: v5e
topology: v5e:2x2
jax: 0.10.0
libtpu: 0.0.40
codegen_flags: <defaults>
</compile_context>

<pallas_src>
import functools

import jax
import jax.numpy as jnp
import numpy as np
from jax.experimental import pallas as pl
from jax.experimental.pallas import tpu as pltpu


# ----------------------------------------------------------------------------
# Recurrent GN core: one pallas_call, one grid step, pl.loop over time inside.
# ----------------------------------------------------------------------------
def _recurrent_gn_kernel(
    gx_ref,       # [T, N, nh]   encoded node features (all steps)
    ge_ref,       # [T, E, eh]   encoded edge features (all steps)
    g0_ref,       # [1, gh]      encoded global of step 0 (h_init.y)
    oh_s_ref,     # [T, E, N]    sender one-hot (gather)
    oh_r_ref,     # [T, E, N]    receiver one-hot (gather)
    oh_sT_ref,    # [T, N, E]    sender one-hot transposed (scatter_add)
    oh_rT_ref,    # [T, N, E]    receiver one-hot transposed (scatter_add)
    w_x_ref,      # [nh, 2*eh+nh]   packed: [W_eb_x_snd | W_eb_x_rcv | W_nb_x]
    w_h_ref,      # [nh, 2*eh+nh]   packed: [W_eb_h_snd | W_eb_h_rcv | W_nb_h]
    w_ee_ref,     # [eh, eh]        W_eb rows for encoded edge
    w_he_ref,     # [eh, eh]        W_eb rows for h_e
    w_g_ref,      # [gh, eh+nh+gh]  packed: [W_eb_g | W_nb_g | W_gb_g]
    b_all_ref,    # [1, eh+nh+gh]   packed: [b_eb | b_nb | b_gb]
    w_en_ref,     # [eh, 2*nh]      packed: [W_nb_recv | W_nb_sent]
    w_gb_ne_ref,  # [nh+eh, gh]     W_gb rows for [mean_n ; mean_e]
    xout_ref,     # [T, N, nh]      output: n_new per step
    hx_ref, he_ref, hg_ref,         # VMEM scratch: recurrent latent state
    *, n_nodes, n_edges, node_h, edge_h, global_h, n_steps):
  f32 = jnp.float32
  nh, eh, gh = node_h, edge_h, global_h

  def dot(a, b):
    return jnp.dot(a, b, preferred_element_type=f32)

  # h_init = encoded graph 0 (lives in VMEM scratch for the whole recurrence)
  hx_ref[...] = gx_ref[0]
  he_ref[...] = ge_ref[0]
  hg_ref[...] = g0_ref[...]

  inv_n = 1.0 / n_nodes
  inv_e = 1.0 / n_edges

  @pl.loop(0, n_steps)
  def _(t):
    gx = gx_ref[t]         # [N, nh]
    ge = ge_ref[t]         # [E, eh]
    oh_s = oh_s_ref[t]     # [E, N]
    oh_r = oh_r_ref[t]     # [E, N]
    oh_sT = oh_sT_ref[t]   # [N, E]
    oh_rT = oh_rT_ref[t]   # [N, E]
    h_x = hx_ref[...]
    h_e = he_ref[...]
    h_g = hg_ref[...]

    # Node-level projections (N rows) for edge-sender / edge-receiver /
    # node-self, computed BEFORE gathering to E rows (transform-then-gather).
    proj_x = dot(gx, w_x_ref[...]) + dot(h_x, w_h_ref[...])      # [N, 2eh+nh]
    # All global-conditioned contributions + all biases: one M=1 push.
    proj_gb = dot(h_g, w_g_ref[...]) + b_all_ref[...]            # [1, eh+nh+gh]

    # ------------------------------ edge block ------------------------------
    e_pre = (dot(ge, w_ee_ref[...])
             + dot(h_e, w_he_ref[...])
             + dot(oh_s, proj_x[:, 0:eh])
             + dot(oh_r, proj_x[:, eh:2 * eh])
             + proj_gb[:, 0:eh])
    e_new = jnp.maximum(e_pre, 0.0)

    # ------------------- node block (transform-then-scatter) ----------------
    proj_e = dot(e_new, w_en_ref[...])                           # [E, 2nh]
    n_pre = (proj_x[:, 2 * eh:2 * eh + nh]
             + dot(oh_rT, proj_e[:, 0:nh])
             + dot(oh_sT, proj_e[:, nh:2 * nh])
             + proj_gb[:, eh:eh + nh])
    n_new = jnp.maximum(n_pre, 0.0)

    # ------------------------------ global block ----------------------------
    mean_n = jnp.sum(n_new, axis=0, keepdims=True) * inv_n
    mean_e = jnp.sum(e_new, axis=0, keepdims=True) * inv_e
    g_pre = (dot(mean_n, w_gb_ne_ref[0:nh, :])
             + dot(mean_e, w_gb_ne_ref[nh:nh + eh, :])
             + proj_gb[:, eh + nh:])
    g_new = jnp.maximum(g_pre, 0.0)

    # carry recurrent state; emit n_new for the hoisted decoders
    hx_ref[...] = n_new
    he_ref[...] = e_new
    hg_ref[...] = g_new
    xout_ref[t] = n_new


# ----------------------------------------------------------------------------
# Hoisted decoders: both MLPs batched over all T*N rows, single lane-dense out.
# ----------------------------------------------------------------------------
def _decoder_kernel(x_ref, w1_ref, b1_ref, w2_ref, b2_ref, out_ref):
  f32 = jnp.float32
  h = jnp.maximum(
      jnp.dot(x_ref[...], w1_ref[...], preferred_element_type=f32)
      + b1_ref[...], 0.0)
  out_ref[...] = (jnp.dot(h, w2_ref[...], preferred_element_type=f32)
                  + b2_ref[...]).astype(out_ref.dtype)


def _full_spec(shape):
  if len(shape) == 2:
    return pl.BlockSpec(shape, lambda i: (0, 0))
  return pl.BlockSpec(shape, lambda i: (0, 0, 0))


# ----------------------------------------------------------------------------
# Wrapper
# ----------------------------------------------------------------------------
def ablation_2_forward(params, node_attr, edge_index, edge_attr, global_attr):
  """node_attr [T,N,in], edge_index [T,2,E], edge_attr [T,E,1], global_attr [T,1]."""
  f32 = jnp.float32
  T, N, input_size = node_attr.shape
  E = edge_attr.shape[1]

  def wb(name):
    w, b = params[name]
    return w.astype(f32), b.reshape(1, -1).astype(f32)

  w_ne, b_ne = wb("node_enc")
  w_ee, b_ee = wb("edge_enc")
  w_ge, b_ge = wb("global_enc")
  w_eb, b_eb = wb("eb")
  w_nb, b_nb = wb("nb")
  w_gb, b_gb = wb("gb")
  w_d1, b_d1 = wb("node_dec1")
  w_d2, b_d2 = wb("node_dec2")
  w_di1, b_di1 = wb("node_dec_in1")
  w_di2, b_di2 = wb("node_dec_in2")

  nh = w_ne.shape[1]
  eh = w_ee.shape[1]
  gh = w_gb.shape[1]
  out_size = w_d2.shape[1]
  assert eh == gh, "global_enc width quirk requires edge_h == global_h"

  # ---- encoders: batched over ALL steps (state-independent, hoisted) -------
  gx_all = jax.nn.relu(
      jnp.einsum("tni,ih->tnh", node_attr.astype(f32), w_ne) + b_ne)  # [T,N,nh]
  ge_all = jax.nn.relu(edge_attr.astype(f32) * w_ee + b_ee)           # [T,E,eh]
  g0_enc = jax.nn.relu(
      global_attr[0].reshape(1, 1).astype(f32) @ w_ge + b_ge)         # [1,gh]

  # ---- incidence one-hots (exact in f32), precomputed for all steps --------
  snd = edge_index[:, 0, :].astype(jnp.int32)
  rcv = edge_index[:, 1, :].astype(jnp.int32)
  oh_s = jax.nn.one_hot(snd, N, dtype=f32)        # [T,E,N]
  oh_r = jax.nn.one_hot(rcv, N, dtype=f32)        # [T,E,N]
  oh_sT = jnp.swapaxes(oh_s, 1, 2)                # [T,N,E]
  oh_rT = jnp.swapaxes(oh_r, 1, 2)                # [T,N,E]

  # ---- host-side weight packing (fewer, wider MXU pushes per step) ---------
  # eb row layout: [ge(eh), h_e(eh), gx_snd(nh), hx_snd(nh), gx_rcv(nh),
  #                 hx_rcv(nh), h_g(gh)]
  w_x_pack = jnp.concatenate(
      [w_eb[2 * eh:2 * eh + nh], w_eb[2 * eh + 2 * nh:2 * eh + 3 * nh],
       w_nb[0:nh]], axis=1)                                    # [nh, 2eh+nh]
  w_h_pack = jnp.concatenate(
      [w_eb[2 * eh + nh:2 * eh + 2 * nh],
       w_eb[2 * eh + 3 * nh:2 * eh + 4 * nh], w_nb[nh:2 * nh]], axis=1)
  w_g_pack = jnp.concatenate(
      [w_eb[2 * eh + 4 * nh:], w_nb[2 * nh + 2 * eh:], w_gb[nh + eh:]],
      axis=1)                                                  # [gh, eh+nh+gh]
  b_all = jnp.concatenate([b_eb, b_nb, b_gb], axis=1)          # [1, eh+nh+gh]
  w_ee_e = w_eb[0:eh]
  w_he_e = w_eb[eh:2 * eh]
  # nb row layout: [gx(nh), h_x(nh), recv(eh), sent(eh), h_g(gh)]
  w_en_pack = jnp.concatenate(
      [w_nb[2 * nh:2 * nh + eh], w_nb[2 * nh + eh:2 * nh + 2 * eh]], axis=1)
  w_gb_ne = w_gb[0:nh + eh]                                    # [nh+eh, gh]

  rec_inputs = (gx_all, ge_all, g0_enc, oh_s, oh_r, oh_sT, oh_rT,
                w_x_pack, w_h_pack, w_ee_e, w_he_e, w_g_pack, b_all,
                w_en_pack, w_gb_ne)

  xout = pl.pallas_call(
      functools.partial(_recurrent_gn_kernel, n_nodes=N, n_edges=E,
                        node_h=nh, edge_h=eh, global_h=gh, n_steps=T),
      out_shape=jax.ShapeDtypeStruct((T, N, nh), f32),
      grid=(1,),
      in_specs=[_full_spec(a.shape) for a in rec_inputs],
      out_specs=_full_spec((T, N, nh)),
      scratch_shapes=[pltpu.VMEM((N, nh), f32),
                      pltpu.VMEM((E, eh), f32),
                      pltpu.VMEM((1, gh), f32)],
      compiler_params=pltpu.CompilerParams(
          dimension_semantics=("arbitrary",)),   # recurrent -> serial
  )(*rec_inputs)

  # ---- decoders: hoisted, batched over T*N rows, single lane-dense output --
  w_dec1 = jnp.concatenate([w_d1, w_di1], axis=1)              # [nh, 2nh]
  b_dec1 = jnp.concatenate([b_d1, b_di1], axis=1)              # [1, 2nh]
  w_dec2 = jnp.concatenate(
      [jnp.concatenate([w_d2, jnp.zeros((nh, input_size), f32)], axis=1),
       jnp.concatenate([jnp.zeros((nh, out_size), f32), w_di2], axis=1)],
      axis=0)                                                  # [2nh, out+in]
  b_dec2 = jnp.concatenate([b_d2, b_di2], axis=1)              # [1, out+in]

  x_flat = xout.reshape(T * N, nh)
  dec_inputs = (x_flat, w_dec1, b_dec1, w_dec2, b_dec2)
  dec_out = pl.pallas_call(
      _decoder_kernel,
      out_shape=jax.ShapeDtypeStruct((T * N, out_size + input_size), f32),
      grid=(1,),
      in_specs=[_full_spec(a.shape) for a in dec_inputs],
      out_specs=_full_spec((T * N, out_size + input_size)),
      compiler_params=pltpu.CompilerParams(
          dimension_semantics=("parallel",)),
  )(*dec_inputs)

  dec_out = dec_out.reshape(T, N, out_size + input_size)
  output_nodes = dec_out[:, :, :out_size]
  pred_inputs = dec_out[:, :, out_size:]

  # TODO(synk): SAITS branch / recons+imputed losses are unused in this
  # forward; the reference module returns constants for them.
  return output_nodes, pred_inputs, 0.0, 0.0, 0.0


# ----------------------------------------------------------------------------
# Parameter construction (deterministic, synthetic)
# ----------------------------------------------------------------------------
def init_linear(key, fan_in, fan_out):
  kw, kb = jax.random.split(key)
  w = jax.random.normal(kw, (fan_in, fan_out), jnp.float32) / jnp.sqrt(float(fan_in))
  b = 0.01 * jax.random.normal(kb, (fan_out,), jnp.float32)
  return w, b


def make_params(key, input_size, edge_h, node_h, global_h, out_size):
  ks = jax.random.split(key, 10)
  eb_in = (edge_h + node_h * 2) * 2 + global_h
  nb_in = node_h * 2 + edge_h * 2 + global_h
  gb_in = node_h + edge_h + global_h
  return {
      "node_enc":     init_linear(ks[0], input_size, node_h),
      "edge_enc":     init_linear(ks[1], 1, edge_h),
      "global_enc":   init_linear(ks[2], 1, edge_h),    # as written in __init__
      "eb":           init_linear(ks[3], eb_in, edge_h),
      "nb":           init_linear(ks[4], nb_in, node_h),
      "gb":           init_linear(ks[5], gb_in, global_h),
      "node_dec1":    init_linear(ks[6], node_h, node_h),
      "node_dec2":    init_linear(ks[7], node_h, out_size),
      "node_dec_in1": init_linear(ks[8], node_h, node_h),
      "node_dec_in2": init_linear(ks[9], node_h, input_size),
  }


# ----------------------------------------------------------------------------
# Pure-JAX reference (mirrors the original module's forward)
# ----------------------------------------------------------------------------
def reference_forward(params, node_attr, edge_index, edge_attr, global_attr):
  hp = jax.lax.Precision.HIGHEST

  def lin(x, w, b, relu=True):
    y = jnp.dot(x, w, precision=hp) + b
    return jnp.maximum(y, 0.0) if relu else y

  T, N, _ = node_attr.shape
  enc = []
  for t in range(T):
    x = lin(node_attr[t], *params["node_enc"])
    e = lin(edge_attr[t], *params["edge_enc"])
    g = lin(global_attr[t].reshape(1, 1), *params["global_enc"])
    enc.append((x, e, g))
  h_x, h_e, h_g = enc[0]
  outs, preds = [], []
  for t in range(T):
    gx, ge, _ = enc[t]
    snd = edge_index[t, 0]
    rcv = edge_index[t, 1]
    E = snd.shape[0]
    gdim = h_g.shape[1]
    e_in = jnp.concatenate([ge, h_e, gx[snd], h_x[snd], gx[rcv], h_x[rcv],
                            jnp.broadcast_to(h_g, (E, gdim))], axis=1)
    e_new = lin(e_in, *params["eb"])
    recv_agg = jnp.zeros((N, e_new.shape[1]), e_new.dtype).at[rcv].add(e_new)
    sent_agg = jnp.zeros((N, e_new.shape[1]), e_new.dtype).at[snd].add(e_new)
    n_in = jnp.concatenate([gx, h_x, recv_agg, sent_agg,
                            jnp.broadcast_to(h_g, (N, gdim))], axis=1)
    n_new = lin(n_in, *params["nb"])
    g_in = jnp.concatenate([jnp.mean(n_new, 0, keepdims=True),
                            jnp.mean(e_new, 0, keepdims=True), h_g], axis=1)
    g_new = lin(g_in, *params["gb"])
    h_x, h_e, h_g = n_new, e_new, g_new
    h1 = lin(n_new, *params["node_dec1"])
    outs.append(lin(h1, *params["node_dec2"], relu=False))
    h2 = lin(n_new, *params["node_dec_in1"])
    preds.append(lin(h2, *params["node_dec_in2"], relu=False))
  return jnp.stack(outs), jnp.stack(preds)


# ----------------------------------------------------------------------------
if __name__ == "__main__":
  key = jax.random.PRNGKey(0)

  # Small config consistent with the module's __init__ signature.
  n_nodes, n_edges = 8, 16
  node_attr_size = 8                       # input_size
  edge_h = node_h = global_h = 16          # edge_h == global_h keeps dims consistent
  out_size = 4
  num_processing_steps = 3

  params = make_params(jax.random.fold_in(key, 0),
                       node_attr_size, edge_h, node_h, global_h, out_size)

  node_attrs, edge_indices, edge_attrs, globals_ = [], [], [], []
  for t in range(num_processing_steps):
    kt = jax.random.fold_in(key, 100 + t)
    k1, k2, k3, k4 = jax.random.split(kt, 4)
    node_attrs.append(jax.random.normal(k1, (n_nodes, node_attr_size), jnp.float32))
    snd = jax.random.randint(k2, (n_edges,), 0, n_nodes)
    rcv = jax.random.randint(k3, (n_edges,), 0, n_nodes)
    edge_indices.append(jnp.stack([snd, rcv], axis=0))                   # [2, E]
    edge_attrs.append(jax.random.normal(k4, (n_edges, 1), jnp.float32))  # [E, 1]
    globals_.append(jnp.full((1,), float(t + 1), jnp.float32))           # [1]
  node_attr = jnp.stack(node_attrs)       # [T, N, F]
  edge_index = jnp.stack(edge_indices)    # [T, 2, E]
  edge_attr = jnp.stack(edge_attrs)       # [T, E, 1]
  global_attr = jnp.stack(globals_)       # [T, 1]

  fwd = jax.jit(ablation_2_forward)
  output_nodes, pred_inputs, _, _, _ = fwd(params, node_attr, edge_index,
                                           edge_attr, global_attr)
  jax.block_until_ready((output_nodes, pred_inputs))

  # Correctness vs. pure-JAX reference of the same forward.
  ref_out, ref_pred = reference_forward(params, node_attr, edge_index,
                                        edge_attr, global_attr)
  assert output_nodes.shape == (num_processing_steps, n_nodes, out_size)
  assert pred_inputs.shape == (num_processing_steps, n_nodes, node_attr_size)
  assert np.allclose(np.asarray(output_nodes), np.asarray(ref_out),
                     rtol=2e-2, atol=1e-2), \
      float(np.max(np.abs(np.asarray(output_nodes) - np.asarray(ref_out))))
  assert np.allclose(np.asarray(pred_inputs), np.asarray(ref_pred),
                     rtol=2e-2, atol=1e-2), \
      float(np.max(np.abs(np.asarray(pred_inputs) - np.asarray(ref_pred))))
  print("KERNEL_OK")
</pallas_src>

<mosaic_0001>
module attributes {stable_mosaic.version = 11 : i64} {
  func.func @_recurrent_gn_kernel(%arg0: i32, %arg1: memref<3x8x16xf32, #tpu.memory_space<vmem>>, %arg2: memref<3x16x16xf32, #tpu.memory_space<vmem>>, %arg3: memref<1x16xf32, #tpu.memory_space<vmem>>, %arg4: memref<3x16x8xf32, #tpu.memory_space<vmem>>, %arg5: memref<3x16x8xf32, #tpu.memory_space<vmem>>, %arg6: memref<3x8x16xf32, #tpu.memory_space<vmem>>, %arg7: memref<3x8x16xf32, #tpu.memory_space<vmem>>, %arg8: memref<16x48xf32, #tpu.memory_space<vmem>>, %arg9: memref<16x48xf32, #tpu.memory_space<vmem>>, %arg10: memref<16x16xf32, #tpu.memory_space<vmem>>, %arg11: memref<16x16xf32, #tpu.memory_space<vmem>>, %arg12: memref<16x48xf32, #tpu.memory_space<vmem>>, %arg13: memref<1x48xf32, #tpu.memory_space<vmem>>, %arg14: memref<16x32xf32, #tpu.memory_space<vmem>>, %arg15: memref<32x16xf32, #tpu.memory_space<vmem>>, %arg16: memref<3x8x16xf32, #tpu.memory_space<vmem>>, %arg17: memref<8x16xf32, #tpu.memory_space<vmem>>, %arg18: memref<16x16xf32, #tpu.memory_space<vmem>>, %arg19: memref<1x16xf32, #tpu.memory_space<vmem>>) attributes {dimension_semantics = [#tpu.dimension_semantics<arbitrary>], iteration_bounds = array<i64: 1>, scalar_prefetch = 0 : i64, scratch_operands = 3 : i64, tpu.core_type = #tpu.core_type<tc>, window_params = [{pipeline_mode = #tpu.pipeline_mode<synchronous>, transform_indices = @transform_0, window_bounds = array<i64: 3, 8, 16>}, {pipeline_mode = #tpu.pipeline_mode<synchronous>, transform_indices = @transform_1, window_bounds = array<i64: 3, 16, 16>}, {pipeline_mode = #tpu.pipeline_mode<synchronous>, transform_indices = @transform_2, window_bounds = array<i64: 1, 16>}, {pipeline_mode = #tpu.pipeline_mode<synchronous>, transform_indices = @transform_3, window_bounds = array<i64: 3, 16, 8>}, {pipeline_mode = #tpu.pipeline_mode<synchronous>, transform_indices = @transform_4, window_bounds = array<i64: 3, 16, 8>}, {pipeline_mode = #tpu.pipeline_mode<synchronous>, transform_indices = @transform_5, window_bounds = array<i64: 3, 8, 16>}, {pipeline_mode = #tpu.pipeline_mode<synchronous>, transform_indices = @transform_6, window_bounds = array<i64: 3, 8, 16>}, {pipeline_mode = #tpu.pipeline_mode<synchronous>, transform_indices = @transform_7, window_bounds = array<i64: 16, 48>}, {pipeline_mode = #tpu.pipeline_mode<synchronous>, transform_indices = @transform_8, window_bounds = array<i64: 16, 48>}, {pipeline_mode = #tpu.pipeline_mode<synchronous>, transform_indices = @transform_9, window_bounds = array<i64: 16, 16>}, {pipeline_mode = #tpu.pipeline_mode<synchronous>, transform_indices = @transform_10, window_bounds = array<i64: 16, 16>}, {pipeline_mode = #tpu.pipeline_mode<synchronous>, transform_indices = @transform_11, window_bounds = array<i64: 16, 48>}, {pipeline_mode = #tpu.pipeline_mode<synchronous>, transform_indices = @transform_12, window_bounds = array<i64: 1, 48>}, {pipeline_mode = #tpu.pipeline_mode<synchronous>, transform_indices = @transform_13, window_bounds = array<i64: 16, 32>}, {pipeline_mode = #tpu.pipeline_mode<synchronous>, transform_indices = @transform_14, window_bounds = array<i64: 32, 16>}, {pipeline_mode = #tpu.pipeline_mode<synchronous>, transform_indices = @transform_15, window_bounds = array<i64: 3, 8, 16>}]} {
    %c0 = arith.constant 0 : index
    %c0_0 = arith.constant 0 : index
    %c0_1 = arith.constant 0 : index
    %0 = vector.load %arg1[%c0, %c0_0, %c0_1] : memref<3x8x16xf32, #tpu.memory_space<vmem>>, vector<1x8x16xf32>
    %1 = vector.shape_cast %0 : vector<1x8x16xf32> to vector<8x16xf32>
    %c0_2 = arith.constant 0 : index
    %c0_3 = arith.constant 0 : index
    %2 = vector.load %arg17[%c0_2, %c0_3] : memref<8x16xf32, #tpu.memory_space<vmem>>, vector<8x16xf32>
    tpu.vector_store %arg17[%c0_2, %c0_3], %1 {strides = array<i32>} : memref<8x16xf32, #tpu.memory_space<vmem>>, vector<8x16xf32>,
    %c0_4 = arith.constant 0 : index
    %c0_5 = arith.constant 0 : index
    %c0_6 = arith.constant 0 : index
    %3 = vector.load %arg2[%c0_4, %c0_5, %c0_6] : memref<3x16x16xf32, #tpu.memory_space<vmem>>, vector<1x16x16xf32>
    %4 = vector.shape_cast %3 : vector<1x16x16xf32> to vector<16x16xf32>
    %c0_7 = arith.constant 0 : index
    %c0_8 = arith.constant 0 : index
    %5 = vector.load %arg18[%c0_7, %c0_8] : memref<16x16xf32, #tpu.memory_space<vmem>>, vector<16x16xf32>
    tpu.vector_store %arg18[%c0_7, %c0_8], %4 {strides = array<i32>} : memref<16x16xf32, #tpu.memory_space<vmem>>, vector<16x16xf32>,
    %c0_9 = arith.constant 0 : index
    %c0_10 = arith.constant 0 : index
    %6 = vector.load %arg3[%c0_9, %c0_10] : memref<1x16xf32, #tpu.memory_space<vmem>>, vector<1x16xf32>
    %c0_11 = arith.constant 0 : index
    %c0_12 = arith.constant 0 : index
    %7 = vector.load %arg19[%c0_11, %c0_12] : memref<1x16xf32, #tpu.memory_space<vmem>>, vector<1x16xf32>
    tpu.vector_store %arg19[%c0_11, %c0_12], %6 {strides = array<i32>} : memref<1x16xf32, #tpu.memory_space<vmem>>, vector<1x16xf32>,
    %c0_i32 = arith.constant 0 : i32
    %c3_i32 = arith.constant 3 : i32
    %8 = arith.addi %c0_i32, %c3_i32 : i32
    %c1_i32 = arith.constant 1 : i32
    scf.for %arg20 = %c0_i32 to %8 step %c1_i32  : i32 {
      %c1_i32_14 = arith.constant 1 : i32
      %9 = arith.muli %arg20, %c1_i32_14 : i32
      %c0_i32_15 = arith.constant 0 : i32
      %10 = arith.addi %c0_i32_15, %9 : i32
      %11 = arith.index_cast %10 : i32 to index
      %c0_16 = arith.constant 0 : index
      %c0_17 = arith.constant 0 : index
      %12 = vector.load %arg1[%11, %c0_16, %c0_17] : memref<3x8x16xf32, #tpu.memory_space<vmem>>, vector<1x8x16xf32>
      %13 = vector.shape_cast %12 : vector<1x8x16xf32> to vector<8x16xf32>
      %14 = arith.index_cast %10 : i32 to index
      %c0_18 = arith.constant 0 : index
      %c0_19 = arith.constant 0 : index
      %15 = vector.load %arg2[%14, %c0_18, %c0_19] : memref<3x16x16xf32, #tpu.memory_space<vmem>>, vector<1x16x16xf32>
      %16 = vector.shape_cast %15 : vector<1x16x16xf32> to vector<16x16xf32>
      %17 = arith.index_cast %10 : i32 to index
      %c0_20 = arith.constant 0 : index
      %c0_21 = arith.constant 0 : index
      %18 = vector.load %arg4[%17, %c0_20, %c0_21] : memref<3x16x8xf32, #tpu.memory_space<vmem>>, vector<1x16x8xf32>
      %19 = vector.shape_cast %18 : vector<1x16x8xf32> to vector<16x8xf32>
      %20 = arith.index_cast %10 : i32 to index
      %c0_22 = arith.constant 0 : index
      %c0_23 = arith.constant 0 : index
      %21 = vector.load %arg5[%20, %c0_22, %c0_23] : memref<3x16x8xf32, #tpu.memory_space<vmem>>, vector<1x16x8xf32>
      %22 = vector.shape_cast %21 : vector<1x16x8xf32> to vector<16x8xf32>
      %23 = arith.index_cast %10 : i32 to index
      %c0_24 = arith.constant 0 : index
      %c0_25 = arith.constant 0 : index
      %24 = vector.load %arg6[%23, %c0_24, %c0_25] : memref<3x8x16xf32, #tpu.memory_space<vmem>>, vector<1x8x16xf32>
      %25 = vector.shape_cast %24 : vector<1x8x16xf32> to vector<8x16xf32>
      %26 = arith.index_cast %10 : i32 to index
      %c0_26 = arith.constant 0 : index
      %c0_27 = arith.constant 0 : index
      %27 = vector.load %arg7[%26, %c0_26, %c0_27] : memref<3x8x16xf32, #tpu.memory_space<vmem>>, vector<1x8x16xf32>
      %28 = vector.shape_cast %27 : vector<1x8x16xf32> to vector<8x16xf32>
      %c0_28 = arith.constant 0 : index
      %c0_29 = arith.constant 0 : index
      %29 = vector.load %arg17[%c0_28, %c0_29] : memref<8x16xf32, #tpu.memory_space<vmem>>, vector<8x16xf32>
      %c0_30 = arith.constant 0 : index
      %c0_31 = arith.constant 0 : index
      %30 = vector.load %arg18[%c0_30, %c0_31] : memref<16x16xf32, #tpu.memory_space<vmem>>, vector<16x16xf32>
      %c0_32 = arith.constant 0 : index
      %c0_33 = arith.constant 0 : index
      %31 = vector.load %arg19[%c0_32, %c0_33] : memref<1x16xf32, #tpu.memory_space<vmem>>, vector<1x16xf32>
      %c0_34 = arith.constant 0 : index
      %c0_35 = arith.constant 0 : index
      %32 = vector.load %arg8[%c0_34, %c0_35] : memref<16x48xf32, #tpu.memory_space<vmem>>, vector<16x48xf32>
      %cst = arith.constant dense<0.000000e+00> : vector<8x48xf32>
      %33 = tpu.matmul %13, %32, %cst {dimension_numbers = #tpu.dot_dimension_numbers<[1], [0], [0], [1], [0, 0, 1, 1], [], []>} : vector<8x16xf32>, vector<16x48xf32>, vector<8x48xf32> -> vector<8x48xf32>
      %c0_36 = arith.constant 0 : index
      %c0_37 = arith.constant 0 : index
      %34 = vector.load %arg9[%c0_36, %c0_37] : memref<16x48xf32, #tpu.memory_space<vmem>>, vector<16x48xf32>
      %cst_38 = arith.constant dense<0.000000e+00> : vector<8x48xf32>
      %35 = tpu.matmul %29, %34, %cst_38 {dimension_numbers = #tpu.dot_dimension_numbers<[1], [0], [0], [1], [0, 0, 1, 1], [], []>} : vector<8x16xf32>, vector<16x48xf32>, vector<8x48xf32> -> vector<8x48xf32>
      %36 = arith.addf %33, %35 : vector<8x48xf32>
      %c0_39 = arith.constant 0 : index
      %c0_40 = arith.constant 0 : index
      %37 = vector.load %arg12[%c0_39, %c0_40] : memref<16x48xf32, #tpu.memory_space<vmem>>, vector<16x48xf32>
      %cst_41 = arith.constant dense<0.000000e+00> : vector<1x48xf32>
      %38 = tpu.matmul %31, %37, %cst_41 {dimension_numbers = #tpu.dot_dimension_numbers<[1], [0], [0], [1], [0, 0, 1, 1], [], []>} : vector<1x16xf32>, vector<16x48xf32>, vector<1x48xf32> -> vector<1x48xf32>
      %c0_42 = arith.constant 0 : index
      %c0_43 = arith.constant 0 : index
      %39 = vector.load %arg13[%c0_42, %c0_43] : memref<1x48xf32, #tpu.memory_space<vmem>>, vector<1x48xf32>
      %40 = arith.addf %38, %39 : vector<1x48xf32>
      %c0_44 = arith.constant 0 : index
      %c0_45 = arith.constant 0 : index
      %41 = vector.load %arg10[%c0_44, %c0_45] : memref<16x16xf32, #tpu.memory_space<vmem>>, vector<16x16xf32>
      %cst_46 = arith.constant dense<0.000000e+00> : vector<16x16xf32>
      %42 = tpu.matmul %16, %41, %cst_46 {dimension_numbers = #tpu.dot_dimension_numbers<[1], [0], [0], [1], [0, 0, 1, 1], [], []>} : vector<16x16xf32>, vector<16x16xf32>, vector<16x16xf32> -> vector<16x16xf32>
      %c0_47 = arith.constant 0 : index
      %c0_48 = arith.constant 0 : index
      %43 = vector.load %arg11[%c0_47, %c0_48] : memref<16x16xf32, #tpu.memory_space<vmem>>, vector<16x16xf32>
      %cst_49 = arith.constant dense<0.000000e+00> : vector<16x16xf32>
      %44 = tpu.matmul %30, %43, %cst_49 {dimension_numbers = #tpu.dot_dimension_numbers<[1], [0], [0], [1], [0, 0, 1, 1], [], []>} : vector<16x16xf32>, vector<16x16xf32>, vector<16x16xf32> -> vector<16x16xf32>
      %45 = arith.addf %42, %44 : vector<16x16xf32>
      %46 = vector.extract_strided_slice %36 {offsets = [0, 0], sizes = [8, 16], strides = [1, 1]} : vector<8x48xf32> to vector<8x16xf32>
      %cst_50 = arith.constant dense<0.000000e+00> : vector<16x16xf32>
      %47 = tpu.matmul %19, %46, %cst_50 {dimension_numbers = #tpu.dot_dimension_numbers<[1], [0], [0], [1], [0, 0, 1, 1], [], []>} : vector<16x8xf32>, vector<8x16xf32>, vector<16x16xf32> -> vector<16x16xf32>
      %48 = arith.addf %45, %47 : vector<16x16xf32>
      %49 = vector.extract_strided_slice %36 {offsets = [0, 16], sizes = [8, 16], strides = [1, 1]} : vector<8x48xf32> to vector<8x16xf32>
      %cst_51 = arith.constant dense<0.000000e+00> : vector<16x16xf32>
      %50 = tpu.matmul %22, %49, %cst_51 {dimension_numbers = #tpu.dot_dimension_numbers<[1], [0], [0], [1], [0, 0, 1, 1], [], []>} : vector<16x8xf32>, vector<8x16xf32>, vector<16x16xf32> -> vector<16x16xf32>
      %51 = arith.addf %48, %50 : vector<16x16xf32>
      %52 = vector.extract_strided_slice %40 {offsets = [0, 0], sizes = [1, 16], strides = [1, 1]} : vector<1x48xf32> to vector<1x16xf32>
      %53 = vector.broadcast %52 : vector<1x16xf32> to vector<16x16xf32>
      %54 = arith.addf %51, %53 : vector<16x16xf32>
      %cst_52 = arith.constant 0.000000e+00 : f32
      %55 = vector.broadcast %cst_52 : f32 to vector<16x16xf32>
      %56 = arith.maximumf %54, %55 : vector<16x16xf32>
      %c0_53 = arith.constant 0 : index
      %c0_54 = arith.constant 0 : index
      %57 = vector.load %arg14[%c0_53, %c0_54] : memref<16x32xf32, #tpu.memory_space<vmem>>, vector<16x32xf32>
      %cst_55 = arith.constant dense<0.000000e+00> : vector<16x32xf32>
      %58 = tpu.matmul %56, %57, %cst_55 {dimension_numbers = #tpu.dot_dimension_numbers<[1], [0], [0], [1], [0, 0, 1, 1], [], []>} : vector<16x16xf32>, vector<16x32xf32>, vector<16x32xf32> -> vector<16x32xf32>
      %59 = vector.extract_strided_slice %36 {offsets = [0, 32], sizes = [8, 16], strides = [1, 1]} : vector<8x48xf32> to vector<8x16xf32>
      %60 = vector.extract_strided_slice %58 {offsets = [0, 0], sizes = [16, 16], strides = [1, 1]} : vector<16x32xf32> to vector<16x16xf32>
      %cst_56 = arith.constant dense<0.000000e+00> : vector<8x16xf32>
      %61 = tpu.matmul %28, %60, %cst_56 {dimension_numbers = #tpu.dot_dimension_numbers<[1], [0], [0], [1], [0, 0, 1, 1], [], []>} : vector<8x16xf32>, vector<16x16xf32>, vector<8x16xf32> -> vector<8x16xf32>
      %62 = arith.addf %59, %61 : vector<8x16xf32>
      %63 = vector.extract_strided_slice %58 {offsets = [0, 16], sizes = [16, 16], strides = [1, 1]} : vector<16x32xf32> to vector<16x16xf32>
      %cst_57 = arith.constant dense<0.000000e+00> : vector<8x16xf32>
      %64 = tpu.matmul %25, %63, %cst_57 {dimension_numbers = #tpu.dot_dimension_numbers<[1], [0], [0], [1], [0, 0, 1, 1], [], []>} : vector<8x16xf32>, vector<16x16xf32>, vector<8x16xf32> -> vector<8x16xf32>
      %65 = arith.addf %62, %64 : vector<8x16xf32>
      %66 = vector.extract_strided_slice %40 {offsets = [0, 16], sizes = [1, 16], strides = [1, 1]} : vector<1x48xf32> to vector<1x16xf32>
      %67 = vector.broadcast %66 : vector<1x16xf32> to vector<8x16xf32>
      %68 = arith.addf %65, %67 : vector<8x16xf32>
      %cst_58 = arith.constant 0.000000e+00 : f32
      %69 = vector.broadcast %cst_58 : f32 to vector<8x16xf32>
      %70 = arith.maximumf %68, %69 : vector<8x16xf32>
      %cst_59 = arith.constant dense<0.000000e+00> : vector<16xf32>
      %71 = vector.multi_reduction <add>, %70, %cst_59 [0] : vector<8x16xf32> to vector<16xf32>
      %72 = vector.shape_cast %71 : vector<16xf32> to vector<1x16xf32>
      %cst_60 = arith.constant 1.250000e-01 : f32
      %73 = vector.broadcast %cst_60 : f32 to vector<1x16xf32>
      %74 = arith.mulf %72, %73 : vector<1x16xf32>
      %cst_61 = arith.constant dense<0.000000e+00> : vector<16xf32>
      %75 = vector.multi_reduction <add>, %56, %cst_61 [0] : vector<16x16xf32> to vector<16xf32>
      %76 = vector.shape_cast %75 : vector<16xf32> to vector<1x16xf32>
      %cst_62 = arith.constant 6.250000e-02 : f32
      %77 = vector.broadcast %cst_62 : f32 to vector<1x16xf32>
      %78 = arith.mulf %76, %77 : vector<1x16xf32>
      %c0_63 = arith.constant 0 : index
      %c0_64 = arith.constant 0 : index
      %79 = vector.load %arg15[%c0_63, %c0_64] : memref<32x16xf32, #tpu.memory_space<vmem>>, vector<16x16xf32>
      %cst_65 = arith.constant dense<0.000000e+00> : vector<1x16xf32>
      %80 = tpu.matmul %74, %79, %cst_65 {dimension_numbers = #tpu.dot_dimension_numbers<[1], [0], [0], [1], [0, 0, 1, 1], [], []>} : vector<1x16xf32>, vector<16x16xf32>, vector<1x16xf32> -> vector<1x16xf32>
      %c16 = arith.constant 16 : index
      %c0_66 = arith.constant 0 : index
      %81 = vector.load %arg15[%c16, %c0_66] : memref<32x16xf32, #tpu.memory_space<vmem>>, vector<16x16xf32>
      %cst_67 = arith.constant dense<0.000000e+00> : vector<1x16xf32>
      %82 = tpu.matmul %78, %81, %cst_67 {dimension_numbers = #tpu.dot_dimension_numbers<[1], [0], [0], [1], [0, 0, 1, 1], [], []>} : vector<1x16xf32>, vector<16x16xf32>, vector<1x16xf32> -> vector<1x16xf32>
      %83 = arith.addf %80, %82 : vector<1x16xf32>
      %84 = vector.extract_strided_slice %40 {offsets = [0, 32], sizes = [1, 16], strides = [1, 1]} : vector<1x48xf32> to vector<1x16xf32>
      %85 = arith.addf %83, %84 : vector<1x16xf32>
      %cst_68 = arith.constant 0.000000e+00 : f32
      %86 = vector.broadcast %cst_68 : f32 to vector<1x16xf32>
      %87 = arith.maximumf %85, %86 : vector<1x16xf32>
      %c0_69 = arith.constant 0 : index
      %c0_70 = arith.constant 0 : index
      %88 = vector.load %arg17[%c0_69, %c0_70] : memref<8x16xf32, #tpu.memory_space<vmem>>, vector<8x16xf32>
      tpu.vector_store %arg17[%c0_69, %c0_70], %70 {strides = array<i32>} : memref<8x16xf32, #tpu.memory_space<vmem>>, vector<8x16xf32>,
      %c0_71 = arith.constant 0 : index
      %c0_72 = arith.constant 0 : index
      %89 = vector.load %arg18[%c0_71, %c0_72] : memref<16x16xf32, #tpu.memory_space<vmem>>, vector<16x16xf32>
      tpu.vector_store %arg18[%c0_71, %c0_72], %56 {strides = array<i32>} : memref<16x16xf32, #tpu.memory_space<vmem>>, vector<16x16xf32>,
      %c0_73 = arith.constant 0 : index
      %c0_74 = arith.constant 0 : index
      %90 = vector.load %arg19[%c0_73, %c0_74] : memref<1x16xf32, #tpu.memory_space<vmem>>, vector<1x16xf32>
      tpu.vector_store %arg19[%c0_73, %c0_74], %87 {strides = array<i32>} : memref<1x16xf32, #tpu.memory_space<vmem>>, vector<1x16xf32>,
      %91 = arith.index_cast %10 : i32 to index
      %c0_75 = arith.constant 0 : index
      %c0_76 = arith.constant 0 : index
      %92 = vector.load %arg16[%91, %c0_75, %c0_76] : memref<3x8x16xf32, #tpu.memory_space<vmem>>, vector<1x8x16xf32>
      %93 = vector.shape_cast %92 : vector<1x8x16xf32> to vector<8x16xf32>
      %94 = vector.shape_cast %70 : vector<8x16xf32> to vector<1x8x16xf32>
      tpu.vector_store %arg16[%91, %c0_75, %c0_76], %94 {strides = array<i32>} : memref<3x8x16xf32, #tpu.memory_space<vmem>>, vector<1x8x16xf32>,
    }
    %c3_i32_13 = arith.constant 3 : i32
    return
  }
  func.func @transform_0(%arg0: i32) -> (i32, i32, i32) {
    %c0_i32 = arith.constant 0 : i32
    %c0_i32_0 = arith.constant 0 : i32
    %c0_i32_1 = arith.constant 0 : i32
    %c0_i32_2 = arith.constant 0 : i32
    return %c0_i32, %c0_i32_0, %c0_i32_1 : i32, i32, i32
  }
  func.func @transform_1(%arg0: i32) -> (i32, i32, i32) {
    %c0_i32 = arith.constant 0 : i32
    %c0_i32_0 = arith.constant 0 : i32
    %c0_i32_1 = arith.constant 0 : i32
    %c0_i32_2 = arith.constant 0 : i32
    return %c0_i32, %c0_i32_0, %c0_i32_1 : i32, i32, i32
  }
  func.func @transform_2(%arg0: i32) -> (i32, i32) {
    %c0_i32 = arith.constant 0 : i32
    %c0_i32_0 = arith.constant 0 : i32
    %c0_i32_1 = arith.constant 0 : i32
    return %c0_i32, %c0_i32_0 : i32, i32
  }
  func.func @transform_3(%arg0: i32) -> (i32, i32, i32) {
    %c0_i32 = arith.constant 0 : i32
    %c0_i32_0 = arith.constant 0 : i32
    %c0_i32_1 = arith.constant 0 : i32
    %c0_i32_2 = arith.constant 0 : i32
    return %c0_i32, %c0_i32_0, %c0_i32_1 : i32, i32, i32
  }
  func.func @transform_4(%arg0: i32) -> (i32, i32, i32) {
    %c0_i32 = arith.constant 0 : i32
    %c0_i32_0 = arith.constant 0 : i32
    %c0_i32_1 = arith.constant 0 : i32
    %c0_i32_2 = arith.constant 0 : i32
    return %c0_i32, %c0_i32_0, %c0_i32_1 : i32, i32, i32
  }
  func.func @transform_5(%arg0: i32) -> (i32, i32, i32) {
    %c0_i32 = arith.constant 0 : i32
    %c0_i32_0 = arith.constant 0 : i32
    %c0_i32_1 = arith.constant 0 : i32
    %c0_i32_2 = arith.constant 0 : i32
    return %c0_i32, %c0_i32_0, %c0_i32_1 : i32, i32, i32
  }
  func.func @transform_6(%arg0: i32) -> (i32, i32, i32) {
    %c0_i32 = arith.constant 0 : i32
    %c0_i32_0 = arith.constant 0 : i32
    %c0_i32_1 = arith.constant 0 : i32
    %c0_i32_2 = arith.constant 0 : i32
    return %c0_i32, %c0_i32_0, %c0_i32_1 : i32, i32, i32
  }
  func.func @transform_7(%arg0: i32) -> (i32, i32) {
    %c0_i32 = arith.constant 0 : i32
    %c0_i32_0 = arith.constant 0 : i32
    %c0_i32_1 = arith.constant 0 : i32
    return %c0_i32, %c0_i32_0 : i32, i32
  }
  func.func @transform_8(%arg0: i32) -> (i32, i32) {
    %c0_i32 = arith.constant 0 : i32
    %c0_i32_0 = arith.constant 0 : i32
    %c0_i32_1 = arith.constant 0 : i32
    return %c0_i32, %c0_i32_0 : i32, i32
  }
  func.func @transform_9(%arg0: i32) -> (i32, i32) {
    %c0_i32 = arith.constant 0 : i32
    %c0_i32_0 = arith.constant 0 : i32
    %c0_i32_1 = arith.constant 0 : i32
    return %c0_i32, %c0_i32_0 : i32, i32
  }
  func.func @transform_10(%arg0: i32) -> (i32, i32) {
    %c0_i32 = arith.constant 0 : i32
    %c0_i32_0 = arith.constant 0 : i32
    %c0_i32_1 = arith.constant 0 : i32
    return %c0_i32, %c0_i32_0 : i32, i32
  }
  func.func @transform_11(%arg0: i32) -> (i32, i32) {
    %c0_i32 = arith.constant 0 : i32
    %c0_i32_0 = arith.constant 0 : i32
    %c0_i32_1 = arith.constant 0 : i32
    return %c0_i32, %c0_i32_0 : i32, i32
  }
  func.func @transform_12(%arg0: i32) -> (i32, i32) {
    %c0_i32 = arith.constant 0 : i32
    %c0_i32_0 = arith.constant 0 : i32
    %c0_i32_1 = arith.constant 0 : i32
    return %c0_i32, %c0_i32_0 : i32, i32
  }
  func.func @transform_13(%arg0: i32) -> (i32, i32) {
    %c0_i32 = arith.constant 0 : i32
    %c0_i32_0 = arith.constant 0 : i32
    %c0_i32_1 = arith.constant 0 : i32
    return %c0_i32, %c0_i32_0 : i32, i32
  }
  func.func @transform_14(%arg0: i32) -> (i32, i32) {
    %c0_i32 = arith.constant 0 : i32
    %c0_i32_0 = arith.constant 0 : i32
    %c0_i32_1 = arith.constant 0 : i32
    return %c0_i32, %c0_i32_0 : i32, i32
  }
  func.func @transform_15(%arg0: i32) -> (i32, i32, i32) {
    %c0_i32 = arith.constant 0 : i32
    %c0_i32_0 = arith.constant 0 : i32
    %c0_i32_1 = arith.constant 0 : i32
    %c0_i32_2 = arith.constant 0 : i32
    return %c0_i32, %c0_i32_0, %c0_i32_1 : i32, i32, i32
  }
}

module attributes {stable_mosaic.version = 11 : i64} {
  func.func @_decoder_kernel(%arg0: i32, %arg1: memref<24x16xf32, #tpu.memory_space<vmem>>, %arg2: memref<16x32xf32, #tpu.memory_space<vmem>>, %arg3: memref<1x32xf32, #tpu.memory_space<vmem>>, %arg4: memref<32x12xf32, #tpu.memory_space<vmem>>, %arg5: memref<1x12xf32, #tpu.memory_space<vmem>>, %arg6: memref<24x12xf32, #tpu.memory_space<vmem>>) attributes {dimension_semantics = [#tpu.dimension_semantics<parallel>], iteration_bounds = array<i64: 1>, scalar_prefetch = 0 : i64, scratch_operands = 0 : i64, tpu.core_type = #tpu.core_type<tc>, window_params = [{pipeline_mode = #tpu.pipeline_mode<synchronous>, transform_indices = @transform_0, window_bounds = array<i64: 24, 16>}, {pipeline_mode = #tpu.pipeline_mode<synchronous>, transform_indices = @transform_1, window_bounds = array<i64: 16, 32>}, {pipeline_mode = #tpu.pipeline_mode<synchronous>, transform_indices = @transform_2, window_bounds = array<i64: 1, 32>}, {pipeline_mode = #tpu.pipeline_mode<synchronous>, transform_indices = @transform_3, window_bounds = array<i64: 32, 12>}, {pipeline_mode = #tpu.pipeline_mode<synchronous>, transform_indices = @transform_4, window_bounds = array<i64: 1, 12>}, {pipeline_mode = #tpu.pipeline_mode<synchronous>, transform_indices = @transform_5, window_bounds = array<i64: 24, 12>}]} {
    %c0 = arith.constant 0 : index
    %c0_0 = arith.constant 0 : index
    %0 = vector.load %arg1[%c0, %c0_0] : memref<24x16xf32, #tpu.memory_space<vmem>>, vector<24x16xf32>
    %c0_1 = arith.constant 0 : index
    %c0_2 = arith.constant 0 : index
    %1 = vector.load %arg2[%c0_1, %c0_2] : memref<16x32xf32, #tpu.memory_space<vmem>>, vector<16x32xf32>
    %cst = arith.constant dense<0.000000e+00> : vector<24x32xf32>
    %2 = tpu.matmul %0, %1, %cst {dimension_numbers = #tpu.dot_dimension_numbers<[1], [0], [0], [1], [0, 0, 1, 1], [], []>} : vector<24x16xf32>, vector<16x32xf32>, vector<24x32xf32> -> vector<24x32xf32>
    %c0_3 = arith.constant 0 : index
    %c0_4 = arith.constant 0 : index
    %3 = vector.load %arg3[%c0_3, %c0_4] : memref<1x32xf32, #tpu.memory_space<vmem>>, vector<1x32xf32>
    %4 = vector.broadcast %3 : vector<1x32xf32> to vector<24x32xf32>
    %5 = arith.addf %2, %4 : vector<24x32xf32>
    %cst_5 = arith.constant 0.000000e+00 : f32
    %6 = vector.broadcast %cst_5 : f32 to vector<24x32xf32>
    %7 = arith.maximumf %5, %6 : vector<24x32xf32>
    %c0_6 = arith.constant 0 : index
    %c0_7 = arith.constant 0 : index
    %8 = vector.load %arg4[%c0_6, %c0_7] : memref<32x12xf32, #tpu.memory_space<vmem>>, vector<32x12xf32>
    %cst_8 = arith.constant dense<0.000000e+00> : vector<24x12xf32>
    %9 = tpu.matmul %7, %8, %cst_8 {dimension_numbers = #tpu.dot_dimension_numbers<[1], [0], [0], [1], [0, 0, 1, 1], [], []>} : vector<24x32xf32>, vector<32x12xf32>, vector<24x12xf32> -> vector<24x12xf32>
    %c0_9 = arith.constant 0 : index
    %c0_10 = arith.constant 0 : index
    %10 = vector.load %arg5[%c0_9, %c0_10] : memref<1x12xf32, #tpu.memory_space<vmem>>, vector<1x12xf32>
    %11 = vector.broadcast %10 : vector<1x12xf32> to vector<24x12xf32>
    %12 = arith.addf %9, %11 : vector<24x12xf32>
    %c0_11 = arith.constant 0 : index
    %c0_12 = arith.constant 0 : index
    %13 = vector.load %arg6[%c0_11, %c0_12] : memref<24x12xf32, #tpu.memory_space<vmem>>, vector<24x12xf32>
    tpu.vector_store %arg6[%c0_11, %c0_12], %12 {strides = array<i32>} : memref<24x12xf32, #tpu.memory_space<vmem>>, vector<24x12xf32>,
    return
  }
  func.func @transform_0(%arg0: i32) -> (i32, i32) {
    %c0_i32 = arith.constant 0 : i32
    %c0_i32_0 = arith.constant 0 : i32
    %c0_i32_1 = arith.constant 0 : i32
    return %c0_i32, %c0_i32_0 : i32, i32
  }
  func.func @transform_1(%arg0: i32) -> (i32, i32) {
    %c0_i32 = arith.constant 0 : i32
    %c0_i32_0 = arith.constant 0 : i32
    %c0_i32_1 = arith.constant 0 : i32
    return %c0_i32, %c0_i32_0 : i32, i32
  }
  func.func @transform_2(%arg0: i32) -> (i32, i32) {
    %c0_i32 = arith.constant 0 : i32
    %c0_i32_0 = arith.constant 0 : i32
    %c0_i32_1 = arith.constant 0 : i32
    return %c0_i32, %c0_i32_0 : i32, i32
  }
  func.func @transform_3(%arg0: i32) -> (i32, i32) {
    %c0_i32 = arith.constant 0 : i32
    %c0_i32_0 = arith.constant 0 : i32
    %c0_i32_1 = arith.constant 0 : i32
    return %c0_i32, %c0_i32_0 : i32, i32
  }
  func.func @transform_4(%arg0: i32) -> (i32, i32) {
    %c0_i32 = arith.constant 0 : i32
    %c0_i32_0 = arith.constant 0 : i32
    %c0_i32_1 = arith.constant 0 : i32
    return %c0_i32, %c0_i32_0 : i32, i32
  }
  func.func @transform_5(%arg0: i32) -> (i32, i32) {
    %c0_i32 = arith.constant 0 : i32
    %c0_i32_0 = arith.constant 0 : i32
    %c0_i32_1 = arith.constant 0 : i32
    return %c0_i32, %c0_i32_0 : i32, i32
  }
}

</mosaic_0001>

<llo_original>
// kernel: ablation_2_forward.3
$region0: #{ablation_2_forward.3}
  #allocation0 [shape = 'u32[]', space=smem, size = 0x4, offset = 0x4, fixed_abs, tag = 'smem constant byte address 0x4 - core index']
  #allocation1 [shape = 'u32[72,128]{1,0:T(1,128)}', space=vmem, size = 0x9000, scoped, tag = 'internal scratch']
  %s0 = inlined_call_operand.vmem [shape: f32[24,16], index: 0, kind: input, shape index: {}]
  %s1 = inlined_call_operand.vmem [shape: f32[16,32], index: 1, kind: input, shape index: {}]
  %s2 = inlined_call_operand.vmem [shape: f32[1,32], index: 2, kind: input, shape index: {}]
  %s3 = inlined_call_operand.vmem [shape: f32[32,12], index: 3, kind: input, shape index: {}]
  %s4 = inlined_call_operand.vmem [shape: f32[1,12], index: 4, kind: input, shape index: {}]
  %s5 = inlined_call_operand.vmem [shape: f32[24,12], index: 5, kind: output, shape index: {}]
  %s6 = sld [smem:[#allocation0]]
  $region30: #{ablation_2_forward.3} parent=0
    _
  %s8 = ssub.s32 1, %s6
  %s9 = scalar_select 0, %s8, %s6
  // Predicated region
  $region2: #{ablation_2_forward.3} parent=0 // pred_check
    _
  $region3: #{ablation_2_forward.3} parent=0 // pred_check_branch
    %11 = sbr.rel (0) target = $region5
  $region4: #{ablation_2_forward.3} parent=0 // pred_region
    _
  $region5: #{ablation_2_forward.3} parent=0 // pred_fallthru
    _
  // Predicated region
  $region6: #{ablation_2_forward.3} parent=0 // pred_check
    _
  $region7: #{ablation_2_forward.3} parent=0 // pred_check_branch
    %13 = sbr.rel (0) target = $region9
  $region8: #{ablation_2_forward.3} parent=0 // pred_region
    _
  $region9: #{ablation_2_forward.3} parent=0 // pred_fallthru
    _
  // Predicated region
  $region10: #{ablation_2_forward.3} parent=0 // pred_check
    _
  $region11: #{ablation_2_forward.3} parent=0 // pred_check_branch
    %15 = sbr.rel (0) target = $region13
  $region12: #{ablation_2_forward.3} parent=0 // pred_region
    _
  $region13: #{ablation_2_forward.3} parent=0 // pred_fallthru
    _
  // Predicated region
  $region14: #{ablation_2_forward.3} parent=0 // pred_check
    _
  $region15: #{ablation_2_forward.3} parent=0 // pred_check_branch
    %17 = sbr.rel (0) target = $region17
  $region16: #{ablation_2_forward.3} parent=0 // pred_region
    _
  $region17: #{ablation_2_forward.3} parent=0 // pred_fallthru
    _
  // Predicated region
  $region18: #{ablation_2_forward.3} parent=0 // pred_check
    _
  $region19: #{ablation_2_forward.3} parent=0 // pred_check_branch
    %19 = sbr.rel (0) target = $region21
  $region20: #{ablation_2_forward.3} parent=0 // pred_region
    _
  $region21: #{ablation_2_forward.3} parent=0 // pred_fallthru
    _
  %v20 = vld [vmem:[%s0] sm:$0xff]
  %v21 = vld [vmem:[%s0 + $0x8] sm:$0xff]
  %v22 = vld [vmem:[%s0 + $0x10] sm:$0xff]
  %v23 = vld [vmem:[%s1] sm:$0xff]
  %v24 = vld [vmem:[%s1 + $0x8] sm:$0xff]
  %v25 = vld [vmem:[%s2] sm:$0x1]
  %v27 = vperm.slane %v25, 0
  %vm29 = vcmask 130048
  %v31 = vsel %vm29, %v20, 0
  %v34 = vsel %vm29, %v21, 0
  %v37 = vsel %vm29, %v22, 0
  %39 = vmatpush.msra.mxu0 0.0
  %40 = vmatpush.msra.mxu0 0.0
  %41 = vmatpush.msra.mxu0 0.0
  %42 = vmatpush.msra.mxu0 0.0
  %43 = vmatpush.msra.mxu0 0.0
  %44 = vmatpush.msra.mxu0 0.0
  %45 = vmatpush.msra.mxu0 0.0
  %46 = vmatpush.msra.mxu0 0.0
  %47 = vmatpush.msra.mxu0 0.0
  %48 = vmatpush.msra.mxu0 0.0
  %49 = vmatpush.msra.mxu0 0.0
  %50 = vmatpush.msra.mxu0 0.0
  %51 = vmatpush.msra.mxu0 0.0
  %52 = vmatpush.msra.mxu0 0.0
  %53 = vmatpush.msra.mxu0 %v24
  %54 = vmatpush.msra.mxu0 %v23
  %55 = vmatmul.f32.gmra.mxu0 %v31
  %v56 = vpop.f32.mrf.mxu0
  %v57 = vadd.f32 %v27, %v56
  %58 = vmatmul.f32.gmra.mxu0 %v34
  %v59 = vpop.f32.mrf.mxu0
  %v60 = vadd.f32 %v27, %v59
  %61 = vmatmul.f32.gmra.mxu0 %v37
  %v62 = vpop.f32.mrf.mxu0
  %v63 = vadd.f32 %v27, %v62
  %64 = vdwg.mxu0
  %v65 = vmax.f32 %v57, 0.0
  %v66 = vmax.f32 %v60, 0.0
  %v67 = vmax.f32 %v63, 0.0
  %v68 = vld [vmem:[%s3] sm:$0xff]
  %v69 = vld [vmem:[%s3 + $0x8] sm:$0xff]
  %v70 = vld [vmem:[%s3 + $0x10] sm:$0xff]
  %v71 = vld [vmem:[%s3 + $0x18] sm:$0xff]
  %v72 = vld [vmem:[%s4] sm:$0x1]
  %v74 = vperm.slane %v72, 0
  %vm76 = vcmask 261120
  %v78 = vsel %vm76, %v65, 0
  %v81 = vsel %vm76, %v66, 0
  %v84 = vsel %vm76, %v67, 0
  %86 = vmatpush.msra.mxu0 0.0
  %87 = vmatpush.msra.mxu0 0.0
  %88 = vmatpush.msra.mxu0 0.0
  %89 = vmatpush.msra.mxu0 0.0
  %90 = vmatpush.msra.mxu0 0.0
  %91 = vmatpush.msra.mxu0 0.0
  %92 = vmatpush.msra.mxu0 0.0
  %93 = vmatpush.msra.mxu0 0.0
  %94 = vmatpush.msra.mxu0 0.0
  %95 = vmatpush.msra.mxu0 0.0
  %96 = vmatpush.msra.mxu0 0.0
  %97 = vmatpush.msra.mxu0 0.0
  %98 = vmatpush.msra.mxu0 %v71
  %99 = vmatpush.msra.mxu0 %v70
  %100 = vmatpush.msra.mxu0 %v69
  %101 = vmatpush.msra.mxu0 %v68
  %102 = vmatmul.f32.gmra.mxu0 %v78
  %v103 = vpop.f32.mrf.mxu0
  %v104 = vadd.f32 %v74, %v103
  %105 = vmatmul.f32.gmra.mxu0 %v81
  %v106 = vpop.f32.mrf.mxu0
  %v107 = vadd.f32 %v74, %v106
  %108 = vmatmul.f32.gmra.mxu0 %v84
  %v109 = vpop.f32.mrf.mxu0
  %v110 = vadd.f32 %v74, %v109
  %111 = vdwg.mxu0
  %vm112 = vcmask 97280
  %113 = vst.msk [vmem:[%s5] sm:$0xff] %vm112, %v104
  %114 = vst.msk [vmem:[%s5 + $0x8] sm:$0xff] %vm112, %v107
  %115 = vst.msk [vmem:[%s5 + $0x10] sm:$0xff] %vm112, %v110
  // Predicated region
  $region22: #{ablation_2_forward.3} parent=0 // pred_check
    _
  $region23: #{ablation_2_forward.3} parent=0 // pred_check_branch
    %117 = sbr.rel (0) target = $region25
  $region24: #{ablation_2_forward.3} parent=0 // pred_region
    _
  $region25: #{ablation_2_forward.3} parent=0 // pred_fallthru
    _
  // Predicated region
  $region26: #{ablation_2_forward.3} parent=0 // pred_check
    _
  $region27: #{ablation_2_forward.3} parent=0 // pred_check_branch
    %119 = sbr.rel (0) target = $region29
  $region28: #{ablation_2_forward.3} parent=0 // pred_region
    _
  $region29: #{ablation_2_forward.3} parent=0 // pred_fallthru
    _

// kernel: ablation_2_forward.2
$region0: #{ablation_2_forward.2}
  #allocation0 [shape = 'u32[]', space=smem, size = 0x4, offset = 0x4, fixed_abs, tag = 'smem constant byte address 0x4 - core index']
  #allocation1 [shape = 'u32[72,128]{1,0:T(1,128)}', space=vmem, size = 0x9000, scoped, tag = 'internal scratch']
  #allocation2 [shape = 'f32[8,16]{1,0:T(8,128)}', space=vmem, size = 0x1000, scoped, tag = 'scratch operand']
  #allocation3 [shape = 'f32[16,16]{1,0:T(8,128)}', space=vmem, size = 0x2000, scoped, tag = 'scratch operand']
  #allocation4 [shape = 'f32[1,16]{1,0:T(1,128)}', space=vmem, size = 0x200, scoped, tag = 'scratch operand']
  %s0 = inlined_call_operand.vmem [shape: f32[3,8,16], index: 0, kind: input, shape index: {}]
  %s1 = inlined_call_operand.vmem [shape: f32[3,16,16], index: 1, kind: input, shape index: {}]
  %s2 = inlined_call_operand.vmem [shape: f32[1,16], index: 2, kind: input, shape index: {}]
  %s3 = inlined_call_operand.vmem [shape: f32[3,16,8], index: 3, kind: input, shape index: {}]
  %s4 = inlined_call_operand.vmem [shape: f32[3,16,8], index: 4, kind: input, shape index: {}]
  %s5 = inlined_call_operand.vmem [shape: f32[3,8,16], index: 5, kind: input, shape index: {}]
  %s6 = inlined_call_operand.vmem [shape: f32[3,8,16], index: 6, kind: input, shape index: {}]
  %s7 = inlined_call_operand.vmem [shape: f32[16,48], index: 7, kind: input, shape index: {}]
  %s8 = inlined_call_operand.vmem [shape: f32[16,48], index: 8, kind: input, shape index: {}]
  %s9 = inlined_call_operand.vmem [shape: f32[16,16], index: 9, kind: input, shape index: {}]
  %s10 = inlined_call_operand.vmem [shape: f32[16,16], index: 10, kind: input, shape index: {}]
  %s11 = inlined_call_operand.vmem [shape: f32[16,48], index: 11, kind: input, shape index: {}]
  %s12 = inlined_call_operand.vmem [shape: f32[1,48], index: 12, kind: input, shape index: {}]
  %s13 = inlined_call_operand.vmem [shape: f32[16,32], index: 13, kind: input, shape index: {}]
  %s14 = inlined_call_operand.vmem [shape: f32[32,16], index: 14, kind: input, shape index: {}]
  %s15 = inlined_call_operand.vmem [shape: f32[3,8,16], index: 15, kind: output, shape index: {}]
  %s16 = sld [smem:[#allocation0]]
  $region77: #{ablation_2_forward.2} parent=0
    _
  %s18 = ssub.s32 1, %s16
  %s19 = scalar_select 0, %s18, %s16
  // Predicated region
  $region2: #{ablation_2_forward.2} parent=0 // pred_check
    _
  $region3: #{ablation_2_forward.2} parent=0 // pred_check_branch
    %21 = sbr.rel (0) target = $region5
  $region4: #{ablation_2_forward.2} parent=0 // pred_region
    _
  $region5: #{ablation_2_forward.2} parent=0 // pred_fallthru
    _
  // Predicated region
  $region6: #{ablation_2_forward.2} parent=0 // pred_check
    _
  $region7: #{ablation_2_forward.2} parent=0 // pred_check_branch
    %23 = sbr.rel (0) target = $region9
  $region8: #{ablation_2_forward.2} parent=0 // pred_region
    _
  $region9: #{ablation_2_forward.2} parent=0 // pred_fallthru
    _
  // Predicated region
  $region10: #{ablation_2_forward.2} parent=0 // pred_check
    _
  $region11: #{ablation_2_forward.2} parent=0 // pred_check_branch
    %25 = sbr.rel (0) target = $region13
  $region12: #{ablation_2_forward.2} parent=0 // pred_region
    _
  $region13: #{ablation_2_forward.2} parent=0 // pred_fallthru
    _
  // Predicated region
  $region14: #{ablation_2_forward.2} parent=0 // pred_check
    _
  $region15: #{ablation_2_forward.2} parent=0 // pred_check_branch
    %27 = sbr.rel (0) target = $region17
  $region16: #{ablation_2_forward.2} parent=0 // pred_region
    _
  $region17: #{ablation_2_forward.2} parent=0 // pred_fallthru
    _
  // Predicated region
  $region18: #{ablation_2_forward.2} parent=0 // pred_check
    _
  $region19: #{ablation_2_forward.2} parent=0 // pred_check_branch
    %29 = sbr.rel (0) target = $region21
  $region20: #{ablation_2_forward.2} parent=0 // pred_region
    _
  $region21: #{ablation_2_forward.2} parent=0 // pred_fallthru
    _
  // Predicated region
  $region22: #{ablation_2_forward.2} parent=0 // pred_check
    _
  $region23: #{ablation_2_forward.2} parent=0 // pred_check_branch
    %31 = sbr.rel (0) target = $region25
  $region24: #{ablation_2_forward.2} parent=0 // pred_region
    _
  $region25: #{ablation_2_forward.2} parent=0 // pred_fallthru
    _
  // Predicated region
  $region26: #{ablation_2_forward.2} parent=0 // pred_check
    _
  $region27: #{ablation_2_forward.2} parent=0 // pred_check_branch
    %33 = sbr.rel (0) target = $region29
  $region28: #{ablation_2_forward.2} parent=0 // pred_region
    _
  $region29: #{ablation_2_forward.2} parent=0 // pred_fallthru
    _
  // Predicated region
  $region30: #{ablation_2_forward.2} parent=0 // pred_check
    _
  $region31: #{ablation_2_forward.2} parent=0 // pred_check_branch
    %35 = sbr.rel (0) target = $region33
  $region32: #{ablation_2_forward.2} parent=0 // pred_region
    _
  $region33: #{ablation_2_forward.2} parent=0 // pred_fallthru
    _
  // Predicated region
  $region34: #{ablation_2_forward.2} parent=0 // pred_check
    _
  $region35: #{ablation_2_forward.2} parent=0 // pred_check_branch
    %37 = sbr.rel (0) target = $region37
  $region36: #{ablation_2_forward.2} parent=0 // pred_region
    _
  $region37: #{ablation_2_forward.2} parent=0 // pred_fallthru
    _
  // Predicated region
  $region38: #{ablation_2_forward.2} parent=0 // pred_check
    _
  $region39: #{ablation_2_forward.2} parent=0 // pred_check_branch
    %39 = sbr.rel (0) target = $region41
  $region40: #{ablation_2_forward.2} parent=0 // pred_region
    _
  $region41: #{ablation_2_forward.2} parent=0 // pred_fallthru
    _
  // Predicated region
  $region42: #{ablation_2_forward.2} parent=0 // pred_check
    _
  $region43: #{ablation_2_forward.2} parent=0 // pred_check_branch
    %41 = sbr.rel (0) target = $region45
  $region44: #{ablation_2_forward.2} parent=0 // pred_region
    _
  $region45: #{ablation_2_forward.2} parent=0 // pred_fallthru
    _
  // Predicated region
  $region46: #{ablation_2_forward.2} parent=0 // pred_check
    _
  $region47: #{ablation_2_forward.2} parent=0 // pred_check_branch
    %43 = sbr.rel (0) target = $region49
  $region48: #{ablation_2_forward.2} parent=0 // pred_region
    _
  $region49: #{ablation_2_forward.2} parent=0 // pred_fallthru
    _
  // Predicated region
  $region50: #{ablation_2_forward.2} parent=0 // pred_check
    _
  $region51: #{ablation_2_forward.2} parent=0 // pred_check_branch
    %45 = sbr.rel (0) target = $region53
  $region52: #{ablation_2_forward.2} parent=0 // pred_region
    _
  $region53: #{ablation_2_forward.2} parent=0 // pred_fallthru
    _
  // Predicated region
  $region54: #{ablation_2_forward.2} parent=0 // pred_check
    _
  $region55: #{ablation_2_forward.2} parent=0 // pred_check_branch
    %47 = sbr.rel (0) target = $region57
  $region56: #{ablation_2_forward.2} parent=0 // pred_region
    _
  $region57: #{ablation_2_forward.2} parent=0 // pred_fallthru
    _
  // Predicated region
  $region58: #{ablation_2_forward.2} parent=0 // pred_check
    _
  $region59: #{ablation_2_forward.2} parent=0 // pred_check_branch
    %49 = sbr.rel (0) target = $region61
  $region60: #{ablation_2_forward.2} parent=0 // pred_region
    _
  $region61: #{ablation_2_forward.2} parent=0 // pred_fallthru
    _
  %v50 = vld [vmem:[%s0] sm:$0xff]
  %vm51 = vcmask 130048
  %52 = vst.msk [vmem:[#allocation2] sm:$0xff] %vm51, %v50
  %v53 = vld [vmem:[%s1] sm:$0xff]
  %v54 = vld [vmem:[%s1 + $0x8] sm:$0xff]
  %55 = vst.msk [vmem:[#allocation3] sm:$0xff] %vm51, %v53
  %56 = vst.msk [vmem:[#allocation3 + $0x8] sm:$0xff] %vm51, %v54
  %v57 = vld [vmem:[%s2] sm:$0x1]
  %vm58 = vcmask 122880
  %59 = vst.msk [vmem:[#allocation4] sm:$0x1] %vm58, %v57
  loop: start=0, step=1, limit=3
  $region62: #{ablation_2_forward.2} parent=0 // loop_pre_header
    _
  $region63: #{ablation_2_forward.2} parent=0 // loop_header
    %s61 = sphi 0, %s65
    %p62 = scmp.ge.s32.totalorder %s61, 3
  $region64: #{ablation_2_forward.2} parent=0 // loop_header_branch
    %64 = sbr.rel (%p62) target = $region68
  $region65: #{ablation_2_forward.2} parent=0 // loop_body
    %s66 = smul.u32 %s61, 8
    %s67 = scalar_lea.vmem %s0, %s66
    %v68 = vld [vmem:[%s67] sm:$0xff]
    %s69 = smul.u32 %s61, 16
    %s70 = scalar_lea.vmem %s1, %s69
    %v71 = vld [vmem:[%s70] sm:$0xff]
    %v72 = vld [vmem:[%s70 + $0x8] sm:$0xff]
    %s73 = scalar_lea.vmem %s3, %s69
    %v74 = vld [vmem:[%s73] sm:$0xff]
    %v75 = vld [vmem:[%s73 + $0x8] sm:$0xff]
    %s76 = scalar_lea.vmem %s4, %s69
    %v77 = vld [vmem:[%s76] sm:$0xff]
    %v78 = vld [vmem:[%s76 + $0x8] sm:$0xff]
    %s79 = scalar_lea.vmem %s5, %s66
    %v80 = vld [vmem:[%s79] sm:$0xff]
    %s81 = scalar_lea.vmem %s6, %s66
    %v82 = vld [vmem:[%s81] sm:$0xff]
    %v83 = vld [vmem:[#allocation2] sm:$0xff]
    %v84 = vld [vmem:[#allocation3] sm:$0xff]
    %v85 = vld [vmem:[#allocation3 + $0x8] sm:$0xff]
    %v86 = vld [vmem:[#allocation4] sm:$0x1]
    %v87 = vld [vmem:[%s7] sm:$0xff]
    %v88 = vld [vmem:[%s7 + $0x8] sm:$0xff]
    %v89 = vld [vmem:[%s8] sm:$0xff]
    %v90 = vld [vmem:[%s8 + $0x8] sm:$0xff]
    %v92 = vsel %vm51, %v83, 0
    %94 = vmatpush.msra.mxu0 0.0
    %95 = vmatpush.msra.mxu0 0.0
    %96 = vmatpush.msra.mxu0 0.0
    %97 = vmatpush.msra.mxu0 0.0
    %98 = vmatpush.msra.mxu0 0.0
    %99 = vmatpush.msra.mxu0 0.0
    %100 = vmatpush.msra.mxu0 0.0
    %101 = vmatpush.msra.mxu0 0.0
    %102 = vmatpush.msra.mxu0 0.0
    %103 = vmatpush.msra.mxu0 0.0
    %104 = vmatpush.msra.mxu0 0.0
    %105 = vmatpush.msra.mxu0 0.0
    %106 = vmatpush.msra.mxu0 0.0
    %107 = vmatpush.msra.mxu0 0.0
    %108 = vmatpush.msra.mxu0 %v90
    %109 = vmatpush.msra.mxu0 %v89
    %110 = vmatmul.f32.gmra.mxu0 %v92
    %v111 = vpop.f32.mrf.mxu0
    %v112 = vadd.f32 0.0, %v111
    %113 = vdwg.mxu0
    %v115 = vsel %vm51, %v68, 0
    %117 = vmatpush.msra.mxu0 0.0
    %118 = vmatpush.msra.mxu0 0.0
    %119 = vmatpush.msra.mxu0 0.0
    %120 = vmatpush.msra.mxu0 0.0
    %121 = vmatpush.msra.mxu0 0.0
    %122 = vmatpush.msra.mxu0 0.0
    %123 = vmatpush.msra.mxu0 0.0
    %124 = vmatpush.msra.mxu0 0.0
    %125 = vmatpush.msra.mxu0 0.0
    %126 = vmatpush.msra.mxu0 0.0
    %127 = vmatpush.msra.mxu0 0.0
    %128 = vmatpush.msra.mxu0 0.0
    %129 = vmatpush.msra.mxu0 0.0
    %130 = vmatpush.msra.mxu0 0.0
    %131 = vmatpush.msra.mxu0 %v88
    %132 = vmatpush.msra.mxu0 %v87
    %133 = vmatmul.f32.gmra.mxu0 %v115
    %v134 = vpop.f32.mrf.mxu0
    %v135 = vadd.f32 %v112, %v134
    %136 = vdwg.mxu0
    %v137 = vld [vmem:[%s11] sm:$0xff]
    %v138 = vld [vmem:[%s11 + $0x8] sm:$0xff]
    %v139 = vld [vmem:[%s12] sm:$0x1]
    %v141 = vsel %vm51, %v86, 0
    %143 = vmatpush.msra.mxu0 0.0
    %144 = vmatpush.msra.mxu0 0.0
    %145 = vmatpush.msra.mxu0 0.0
    %146 = vmatpush.msra.mxu0 0.0
    %147 = vmatpush.msra.mxu0 0.0
    %148 = vmatpush.msra.mxu0 0.0
    %149 = vmatpush.msra.mxu0 0.0
    %150 = vmatpush.msra.mxu0 0.0
    %151 = vmatpush.msra.mxu0 0.0
    %152 = vmatpush.msra.mxu0 0.0
    %153 = vmatpush.msra.mxu0 0.0
    %154 = vmatpush.msra.mxu0 0.0
    %155 = vmatpush.msra.mxu0 0.0
    %156 = vmatpush.msra.mxu0 0.0
    %157 = vmatpush.msra.mxu0 %v138
    %158 = vmatpush.msra.mxu0 %v137
    %159 = vmatmul.f32.gmra.mxu0 %v141
    %v160 = vpop.f32.mrf.mxu0
    %v161 = vadd.f32 %v139, %v160
    %162 = vdwg.mxu0
    %v163 = vld [vmem:[%s9] sm:$0xff]
    %v164 = vld [vmem:[%s9 + $0x8] sm:$0xff]
    %v165 = vld [vmem:[%s10] sm:$0xff]
    %v166 = vld [vmem:[%s10 + $0x8] sm:$0xff]
    %v168 = vsel %vm51, %v84, 0
    %v171 = vsel %vm51, %v85, 0
    %173 = vmatpush.msra.mxu0 0.0
    %174 = vmatpush.msra.mxu0 0.0
    %175 = vmatpush.msra.mxu0 0.0
    %176 = vmatpush.msra.mxu0 0.0
    %177 = vmatpush.msra.mxu0 0.0
    %178 = vmatpush.msra.mxu0 0.0
    %179 = vmatpush.msra.mxu0 0.0
    %180 = vmatpush.msra.mxu0 0.0
    %181 = vmatpush.msra.mxu0 0.0
    %182 = vmatpush.msra.mxu0 0.0
    %183 = vmatpush.msra.mxu0 0.0
    %184 = vmatpush.msra.mxu0 0.0
    %185 = vmatpush.msra.mxu0 0.0
    %186 = vmatpush.msra.mxu0 0.0
    %187 = vmatpush.msra.mxu0 %v166
    %188 = vmatpush.msra.mxu0 %v165
    %189 = vmatmul.f32.gmra.mxu0 %v168
    %v190 = vpop.f32.mrf.mxu0
    %v191 = vadd.f32 0.0, %v190
    %192 = vmatmul.f32.gmra.mxu0 %v171
    %v193 = vpop.f32.mrf.mxu0
    %v194 = vadd.f32 0.0, %v193
    %195 = vdwg.mxu0
    %v197 = vsel %vm51, %v71, 0
    %v200 = vsel %vm51, %v72, 0
    %202 = vmatpush.msra.mxu0 0.0
    %203 = vmatpush.msra.mxu0 0.0
    %204 = vmatpush.msra.mxu0 0.0
    %205 = vmatpush.msra.mxu0 0.0
    %206 = vmatpush.msra.mxu0 0.0
    %207 = vmatpush.msra.mxu0 0.0
    %208 = vmatpush.msra.mxu0 0.0
    %209 = vmatpush.msra.mxu0 0.0
    %210 = vmatpush.msra.mxu0 0.0
    %211 = vmatpush.msra.mxu0 0.0
    %212 = vmatpush.msra.mxu0 0.0
    %213 = vmatpush.msra.mxu0 0.0
    %214 = vmatpush.msra.mxu0 0.0
    %215 = vmatpush.msra.mxu0 0.0
    %216 = vmatpush.msra.mxu0 %v164
    %217 = vmatpush.msra.mxu0 %v163
    %218 = vmatmul.f32.gmra.mxu0 %v197
    %v219 = vpop.f32.mrf.mxu0
    %v220 = vadd.f32 %v191, %v219
    %221 = vmatmul.f32.gmra.mxu0 %v200
    %v222 = vpop.f32.mrf.mxu0
    %v223 = vadd.f32 %v194, %v222
    %224 = vdwg.mxu0
    %vm225 = vcmask 64512
    %v227 = vsel %vm225, %v74, 0
    %v230 = vsel %vm225, %v75, 0
    %232 = vmatpush.msra.mxu0 0.0
    %233 = vmatpush.msra.mxu0 0.0
    %234 = vmatpush.msra.mxu0 0.0
    %235 = vmatpush.msra.mxu0 0.0
    %236 = vmatpush.msra.mxu0 0.0
    %237 = vmatpush.msra.mxu0 0.0
    %238 = vmatpush.msra.mxu0 0.0
    %239 = vmatpush.msra.mxu0 0.0
    %240 = vmatpush.msra.mxu0 0.0
    %241 = vmatpush.msra.mxu0 0.0
    %242 = vmatpush.msra.mxu0 0.0
    %243 = vmatpush.msra.mxu0 0.0
    %244 = vmatpush.msra.mxu0 0.0
    %245 = vmatpush.msra.mxu0 0.0
    %246 = vmatpush.msra.mxu0 0.0
    %247 = vmatpush.msra.mxu0 %v135
    %248 = vmatmul.f32.gmra.mxu0 %v227
    %v249 = vpop.f32.mrf.mxu0
    %v250 = vadd.f32 0.0, %v249
    %251 = vmatmul.f32.gmra.mxu0 %v230
    %v252 = vpop.f32.mrf.mxu0
    %v253 = vadd.f32 0.0, %v252
    %254 = vdwg.mxu0
    %v255 = vadd.f32 %v220, %v250
    %v256 = vadd.f32 %v223, %v253
    %258 = vrot.lane.b32.xlu0 %v135, 112
    %v259 = vpop.permute.xlu0 %258
    %v262 = vsel %vm225, %v77, 0
    %v265 = vsel %vm225, %v78, 0
    %267 = vmatpush.msra.mxu0 0.0
    %268 = vmatpush.msra.mxu0 0.0
    %269 = vmatpush.msra.mxu0 0.0
    %270 = vmatpush.msra.mxu0 0.0
    %271 = vmatpush.msra.mxu0 0.0
    %272 = vmatpush.msra.mxu0 0.0
    %273 = vmatpush.msra.mxu0 0.0
    %274 = vmatpush.msra.mxu0 0.0
    %275 = vmatpush.msra.mxu0 0.0
    %276 = vmatpush.msra.mxu0 0.0
    %277 = vmatpush.msra.mxu0 0.0
    %278 = vmatpush.msra.mxu0 0.0
    %279 = vmatpush.msra.mxu0 0.0
    %280 = vmatpush.msra.mxu0 0.0
    %281 = vmatpush.msra.mxu0 0.0
    %282 = vmatpush.msra.mxu0 %v259
    %283 = vmatmul.f32.gmra.mxu0 %v262
    %v284 = vpop.f32.mrf.mxu0
    %v285 = vadd.f32 0.0, %v284
    %286 = vmatmul.f32.gmra.mxu0 %v265
    %v287 = vpop.f32.mrf.mxu0
    %v288 = vadd.f32 0.0, %v287
    %289 = vdwg.mxu0
    %v290 = vadd.f32 %v255, %v285
    %v291 = vadd.f32 %v256, %v288
    %v292 = vperm.slane %v161, 0
    %v293 = vadd.f32 %v290, %v292
    %v294 = vadd.f32 %v291, %v292
    %v295 = vmax.f32 %v293, 0.0
    %v296 = vmax.f32 %v294, 0.0
    %v297 = vld [vmem:[%s13] sm:$0xff]
    %v298 = vld [vmem:[%s13 + $0x8] sm:$0xff]
    %v300 = vsel %vm51, %v295, 0
    %v303 = vsel %vm51, %v296, 0
    %305 = vmatpush.msra.mxu0 0.0
    %306 = vmatpush.msra.mxu0 0.0
    %307 = vmatpush.msra.mxu0 0.0
    %308 = vmatpush.msra.mxu0 0.0
    %309 = vmatpush.msra.mxu0 0.0
    %310 = vmatpush.msra.mxu0 0.0
    %311 = vmatpush.msra.mxu0 0.0
    %312 = vmatpush.msra.mxu0 0.0
    %313 = vmatpush.msra.mxu0 0.0
    %314 = vmatpush.msra.mxu0 0.0
    %315 = vmatpush.msra.mxu0 0.0
    %316 = vmatpush.msra.mxu0 0.0
    %317 = vmatpush.msra.mxu0 0.0
    %318 = vmatpush.msra.mxu0 0.0
    %319 = vmatpush.msra.mxu0 %v298
    %320 = vmatpush.msra.mxu0 %v297
    %321 = vmatmul.f32.gmra.mxu0 %v300
    %v322 = vpop.f32.mrf.mxu0
    %v323 = vadd.f32 0.0, %v322
    %324 = vmatmul.f32.gmra.mxu0 %v303
    %v325 = vpop.f32.mrf.mxu0
    %v326 = vadd.f32 0.0, %v325
    %327 = vdwg.mxu0
    %v329 = vsel %vm51, %v82, 0
    %331 = vmatpush.msra.mxu0 0.0
    %332 = vmatpush.msra.mxu0 0.0
    %333 = vmatpush.msra.mxu0 0.0
    %334 = vmatpush.msra.mxu0 0.0
    %335 = vmatpush.msra.mxu0 0.0
    %336 = vmatpush.msra.mxu0 0.0
    %337 = vmatpush.msra.mxu0 0.0
    %338 = vmatpush.msra.mxu0 0.0
    %339 = vmatpush.msra.mxu0 0.0
    %340 = vmatpush.msra.mxu0 0.0
    %341 = vmatpush.msra.mxu0 0.0
    %342 = vmatpush.msra.mxu0 0.0
    %343 = vmatpush.msra.mxu0 0.0
    %344 = vmatpush.msra.mxu0 0.0
    %345 = vmatpush.msra.mxu0 %v326
    %346 = vmatpush.msra.mxu0 %v323
    %347 = vmatmul.f32.gmra.mxu0 %v329
    %v348 = vpop.f32.mrf.mxu0
    %v349 = vadd.f32 0.0, %v348
    %350 = vdwg.mxu0
    %352 = vrot.lane.b32.xlu0 %v349, 32
    %v353 = vpop.permute.xlu0 %352
    %v355 = vadd.f32 %v135, %v353
    %358 = vrot.lane.b32.xlu0 %v323, 112
    %v359 = vpop.permute.xlu0 %358
    %360 = vrot.lane.b32.xlu0 %v326, 112
    %v361 = vpop.permute.xlu0 %360
    %v365 = vsel %vm51, %v80, 0
    %367 = vmatpush.msra.mxu0 0.0
    %368 = vmatpush.msra.mxu0 0.0
    %369 = vmatpush.msra.mxu0 0.0
    %370 = vmatpush.msra.mxu0 0.0
    %371 = vmatpush.msra.mxu0 0.0
    %372 = vmatpush.msra.mxu0 0.0
    %373 = vmatpush.msra.mxu0 0.0
    %374 = vmatpush.msra.mxu0 0.0
    %375 = vmatpush.msra.mxu0 0.0
    %376 = vmatpush.msra.mxu0 0.0
    %377 = vmatpush.msra.mxu0 0.0
    %378 = vmatpush.msra.mxu0 0.0
    %379 = vmatpush.msra.mxu0 0.0
    %380 = vmatpush.msra.mxu0 0.0
    %381 = vmatpush.msra.mxu0 %v361
    %382 = vmatpush.msra.mxu0 %v359
    %383 = vmatmul.f32.gmra.mxu0 %v365
    %v384 = vpop.f32.mrf.mxu0
    %v385 = vadd.f32 0.0, %v384
    %386 = vdwg.mxu0
    %388 = vrot.lane.b32.xlu0 %v385, 32
    %v389 = vpop.permute.xlu0 %388
    %v391 = vadd.f32 %v355, %v389
    %393 = vrot.lane.b32.xlu0 %v292, 16
    %v394 = vpop.permute.xlu0 %393
    %v396 = vadd.f32 %v391, %v394
    %v397 = vmax.f32 %v396, 0.0
    %vm398 = vcmask 392448
    %v399 = vsel %vm398, %v397, 0.0
    %v400 = vrot.slane %v399, 4
    %v401 = vadd.f32 %v399, %v400
    %v402 = vrot.slane %v401, 2
    %v403 = vadd.f32 %v401, %v402
    %v404 = vrot.slane %v403, 1
    %v405 = vadd.f32 %v403, %v404
    %v406 = vmul.f32 %v405, 0.125
    %v407 = vsel %vm51, %v295, 0.0
    %v408 = vsel %vm51, %v296, 0.0
    %v409 = vadd.f32 %v407, %v408
    %v410 = vrot.slane %v409, 4
    %v411 = vadd.f32 %v409, %v410
    %v412 = vrot.slane %v411, 2
    %v413 = vadd.f32 %v411, %v412
    %v414 = vrot.slane %v413, 1
    %v415 = vadd.f32 %v413, %v414
    %v416 = vmul.f32 %v415, 0.0625
    %v417 = vld [vmem:[%s14] sm:$0xff]
    %v418 = vld [vmem:[%s14 + $0x8] sm:$0xff]
    %v419 = vld [vmem:[%s14 + $0x10] sm:$0xff]
    %v420 = vld [vmem:[%s14 + $0x18] sm:$0xff]
    %v422 = vsel %vm51, %v416, 0
    %424 = vmatpush.msra.mxu0 0.0
    %425 = vmatpush.msra.mxu0 0.0
    %426 = vmatpush.msra.mxu0 0.0
    %427 = vmatpush.msra.mxu0 0.0
    %428 = vmatpush.msra.mxu0 0.0
    %429 = vmatpush.msra.mxu0 0.0
    %430 = vmatpush.msra.mxu0 0.0
    %431 = vmatpush.msra.mxu0 0.0
    %432 = vmatpush.msra.mxu0 0.0
    %433 = vmatpush.msra.mxu0 0.0
    %434 = vmatpush.msra.mxu0 0.0
    %435 = vmatpush.msra.mxu0 0.0
    %436 = vmatpush.msra.mxu0 0.0
    %437 = vmatpush.msra.mxu0 0.0
    %438 = vmatpush.msra.mxu0 %v420
    %439 = vmatpush.msra.mxu0 %v419
    %440 = vmatmul.f32.gmra.mxu0 %v422
    %v441 = vpop.f32.mrf.mxu0
    %v442 = vadd.f32 0.0, %v441
    %443 = vdwg.mxu0
    %445 = vrot.lane.b32.xlu0 %v406, 96
    %v446 = vpop.permute.xlu0 %445
    %v447 = vsel %vm51, %v446, 0
    %449 = vmatpush.msra.mxu0 0.0
    %450 = vmatpush.msra.mxu0 0.0
    %451 = vmatpush.msra.mxu0 0.0
    %452 = vmatpush.msra.mxu0 0.0
    %453 = vmatpush.msra.mxu0 0.0
    %454 = vmatpush.msra.mxu0 0.0
    %455 = vmatpush.msra.mxu0 0.0
    %456 = vmatpush.msra.mxu0 0.0
    %457 = vmatpush.msra.mxu0 0.0
    %458 = vmatpush.msra.mxu0 0.0
    %459 = vmatpush.msra.mxu0 0.0
    %460 = vmatpush.msra.mxu0 0.0
    %461 = vmatpush.msra.mxu0 0.0
    %462 = vmatpush.msra.mxu0 0.0
    %463 = vmatpush.msra.mxu0 %v418
    %464 = vmatpush.msra.mxu0 %v417
    %465 = vmatmul.f32.gmra.mxu0 %v447
    %v466 = vpop.f32.mrf.mxu0
    %v467 = vadd.f32 %v442, %v466
    %468 = vdwg.mxu0
    %470 = vrot.lane.b32.xlu0 %v161, 96
    %v471 = vpop.permute.xlu0 %470
    %v473 = vadd.f32 %v467, %v471
    %v474 = vmax.f32 %v473, 0.0
    %476 = vrot.lane.b32.xlu0 %v397, 96
    %v477 = vpop.permute.xlu0 %476
    %479 = vst.msk [vmem:[#allocation2] sm:$0xff] %vm51, %v477
    %480 = vst.msk [vmem:[#allocation3] sm:$0xff] %vm51, %v295
    %481 = vst.msk [vmem:[#allocation3 + $0x8] sm:$0xff] %vm51, %v296
    %482 = vst.msk [vmem:[#allocation4] sm:$0x1] %vm58, %v474
    %s483 = scalar_lea.vmem %s15, %s66
    %484 = vst.msk [vmem:[%s483] sm:$0xff] %vm51, %v477
  $region66: #{ablation_2_forward.2} parent=0 // loop_footer
    %s65 = sadd.s32 1, %s61
  $region67: #{ablation_2_forward.2} parent=0 // loop_footer_branch
    %60 = sbr.rel target = $region63
  $region68: #{ablation_2_forward.2} parent=0 // loop_exit
    _
  // Predicated region
  $region69: #{ablation_2_forward.2} parent=0 // pred_check
    _
  $region70: #{ablation_2_forward.2} parent=0 // pred_check_branch
    %486 = sbr.rel (0) target = $region72
  $region71: #{ablation_2_forward.2} parent=0 // pred_region
    _
  $region72: #{ablation_2_forward.2} parent=0 // pred_fallthru
    _
  // Predicated region
  $region73: #{ablation_2_forward.2} parent=0 // pred_check
    _
  $region74: #{ablation_2_forward.2} parent=0 // pred_check_branch
    %488 = sbr.rel (0) target = $region76
  $region75: #{ablation_2_forward.2} parent=0 // pred_region
    _
  $region76: #{ablation_2_forward.2} parent=0 // pred_fallthru
    _

</llo_original>
